<compile_context>
chip_gen: v5e
topology: v5e:2x2
jax: 0.10.0
libtpu: 0.0.40
codegen_flags: <defaults>
</compile_context>

<pallas_src>
from functools import partial

import jax
import jax.numpy as jnp
import numpy as np
from jax.experimental import pallas as pl
from jax.experimental.pallas import tpu as pltpu


def _round_up(v, m):
    return (v + m - 1) // m * m


def gdu_layer_kernel(x_ref, vw_ref, csum_ref, expb_ref, headb_ref, mm_ref,
                     cvec_ref, out_ref, *, num_gdus, output_size, gd_pad):
    G = num_gdus
    O = output_size
    GO = G * O
    go_pad = _round_up(GO, 8)
    F = x_ref.shape[1]

    x = x_ref[...].astype(jnp.float32)                       # (TB, F)

    # One fused transposed matmul: vw (rows, F) contracted with x (TB, F)
    # along F -> (rows, TB); batch lives on the lane axis from here on.
    r = jax.lax.dot_general(
        vw_ref[...], x,
        dimension_numbers=(((1,), (1,)), ((), ())),
        preferred_element_type=jnp.float32)                  # (rows, TB)

    xv = r[0:gd_pad, :]                                      # 2c * V^T x (pad rows = 0)
    heads = r[gd_pad:gd_pad + GO, :] + headb_ref[...]        # (G*O, TB) linear heads
    xT = r[gd_pad + go_pad:, :]                              # (F, TB) lane-dense x^T

    # c * ||x||^2 replicated over the gd_pad exponent rows, via the idle MXU.
    xsq = jnp.dot(csum_ref[...], xT * xT,
                  preferred_element_type=jnp.float32)        # (gd_pad, TB)

    # RBF kernel values k(x, v_{g,d}) = exp(-c * ||x - v||^2), lane-dense.
    k = jnp.exp(xv + expb_ref[...] - xsq)                    # (gd_pad, TB)

    # betas_g = k(x,x) - 2 * mean_d k(x, v_{g,d}) + mean k(V_g, V_g)
    #         = dot(-2/D block matrix, k) + (1 + mean k(V,V))   [k(x,x) == 1]
    betas_full = jnp.dot(mm_ref[...], k,
                         preferred_element_type=jnp.float32)  # (mm_rows, TB)
    betas = betas_full[0:G, :] + cvec_ref[...]                # (G, TB)

    # kernel_softmax over the GDU axis (G is tiny; explicit row accumulation).
    m = betas[0:1, :]
    for g in range(1, G):
        m = jnp.maximum(m, betas[g:g + 1, :])
    e = jnp.exp(betas - m)                                    # (G, TB)
    s = e[0:1, :]
    for g in range(1, G):
        s = s + e[g:g + 1, :]
    sm = e * (1.0 / s)                                        # exact reciprocal

    # Beta-weighted sum of the per-GDU heads (8-aligned static slices).
    pred = sm[0:1, :] * heads[0:O, :]
    for g in range(1, G):
        pred = pred + sm[g:g + 1, :] * heads[g * O:(g + 1) * O, :]

    out_ref[...] = pred.astype(out_ref.dtype)                 # (O, TB) lane-dense


def pack_gdu_params(domain_bases, weights_t, biases, *, sigma):
    """All x-independent precomputation (done once per parameter update)."""
    G, F, D = domain_bases.shape
    O = weights_t.shape[-1]
    c = 1.0 / (2.0 * float(sigma) * float(sigma))
    gd_pad = _round_up(G * D, 8)
    go_pad = _round_up(G * O, 8)
    mm_rows = _round_up(G, 8)
    f32 = jnp.float32

    domain_bases = domain_bases.astype(f32)
    weights_t = weights_t.astype(f32)
    biases = biases.astype(f32)

    # Fused weight slab (rows, F):
    #   [0, gd_pad)              : 2c * v_{g,d}   (zero pad rows)
    #   [gd_pad, gd_pad+go_pad)  : w_{g,o}        (zero pad rows)
    #   [gd_pad+go_pad, +F)      : identity       (emits x^T lane-dense)
    v_rows = (2.0 * c) * jnp.transpose(domain_bases, (0, 2, 1)).reshape(G * D, F)
    v_rows = jnp.pad(v_rows, ((0, gd_pad - G * D), (0, 0)))
    w_rows = jnp.transpose(weights_t, (0, 2, 1)).reshape(G * O, F)
    w_rows = jnp.pad(w_rows, ((0, go_pad - G * O), (0, 0)))
    vw = jnp.concatenate([v_rows, w_rows, jnp.eye(F, dtype=f32)], axis=0)

    # c-filled (gd_pad, F) operand: csum @ (x^T)^2 == c*||x||^2 replicated
    # over all gd_pad exponent rows.
    csum = jnp.full((gd_pad, F), c, dtype=f32)

    # -c * ||v_{g,d}||^2 per exponent row (0 in pad rows -> exp stays finite).
    vsq = jnp.sum(domain_bases * domain_bases, axis=1).reshape(G * D)
    expb = jnp.pad(-c * vsq, (0, gd_pad - G * D)).reshape(gd_pad, 1)

    headb = biases.reshape(G * O, 1)

    # (-2/D) block mean matrix, zero in pad rows/cols, padded to an MXU-friendly
    # row count.
    mm = jnp.kron(jnp.eye(G, dtype=f32), jnp.full((1, D), -2.0 / D, dtype=f32))
    mm = jnp.pad(mm, ((0, mm_rows - G), (0, gd_pad - G * D)))

    # 1 + mean_{d,d'} k(V_g, V_g): direct squared-difference form (exact,
    # matching the reference / PyTorch formulation).
    diff = domain_bases[:, :, :, None] - domain_bases[:, :, None, :]   # (G,F,D,D)
    l2_vv = jnp.sum(diff * diff, axis=1)                               # (G,D,D)
    kvv_mean = jnp.mean(jnp.exp(-c * l2_vv), axis=(1, 2))
    cvec = (1.0 + kvv_mean).reshape(G, 1)

    return vw, csum, expb, headb, mm, cvec, gd_pad


def _select_tile(batch, block_b):
    """Pick (tile, n_steps, padded_batch). Tile is a multiple of 8 (128 when
    multi-step so the lane-dense output block is legal); large batches get
    >=2 steps so both v7x TensorCores receive work."""
    b = max(int(batch), 8)
    if b > block_b:
        n_steps = -(-b // block_b)
    elif b > 4096:
        n_steps = 2
    else:
        n_steps = 1
    if n_steps == 1:
        tile = _round_up(b, 8)
    else:
        tile = _round_up(-(-b // n_steps), 128)
    return tile, n_steps, tile * n_steps


def gdu_layer_forward(x, domain_bases, weights_t, biases, *, sigma,
                      block_b=8192):
    """x: (B, F); domain_bases: (G, F, D); weights_t: (G, F, O); biases: (G, O).
    Returns (B, O, 1) — same as GDULayer(task='classification').forward."""
    B, F = x.shape
    G, _, D = domain_bases.shape
    O = weights_t.shape[-1]
    GO = G * O

    vw, csum, expb, headb, mm, cvec, gd_pad = pack_gdu_params(
        domain_bases, weights_t, biases, sigma=sigma)
    rows = vw.shape[0]
    mm_rows = mm.shape[0]

    TB, n_steps, B_pad = _select_tile(B, block_b)
    x = x.astype(jnp.float32)
    if B_pad != B:
        # Zero-pad the batch so every tile is full; padded rows stay finite
        # through exp/softmax and are sliced off below.
        x = jnp.pad(x, ((0, B_pad - B), (0, 0)))

    kernel = partial(gdu_layer_kernel, num_gdus=G, output_size=O,
                     gd_pad=gd_pad)

    out_t = pl.pallas_call(
        kernel,
        out_shape=jax.ShapeDtypeStruct((O, B_pad), jnp.float32),
        grid=(n_steps,),
        in_specs=[
            pl.BlockSpec((TB, F), lambda i: (i, 0)),             # x tile (pipelined)
            pl.BlockSpec((rows, F), lambda i: (0, 0)),           # fused weight slab
            pl.BlockSpec((gd_pad, F), lambda i: (0, 0)),         # c-filled sum operand
            pl.BlockSpec((gd_pad, 1), lambda i: (0, 0)),         # -c*||v||^2
            pl.BlockSpec((GO, 1), lambda i: (0, 0)),             # head biases
            pl.BlockSpec((mm_rows, gd_pad), lambda i: (0, 0)),   # -2/D block mean
            pl.BlockSpec((G, 1), lambda i: (0, 0)),              # 1 + mean k(V,V)
        ],
        out_specs=pl.BlockSpec((O, TB), lambda i: (0, i)),       # lane-dense output
        compiler_params=pltpu.CompilerParams(
            dimension_semantics=("parallel",),
            vmem_limit_bytes=32 * 1024 * 1024),
    )(x, vw, csum, expb, headb, mm, cvec)

    # (O, B_pad) -> (B, O, 1)
    return jnp.transpose(out_t[:, :B], (1, 0))[:, :, None]


def reference_forward(x, domain_bases, weights_t, biases, *, sigma):
    """Pure-JAX reference mirroring the PyTorch code (direct squared diffs)."""
    G, _, D = domain_bases.shape
    c = 1.0 / (2.0 * float(sigma) * float(sigma))
    betas = []
    heads = []
    for g in range(G):
        Vg = domain_bases[g]                                  # (F, D)
        xe = x[:, :, None]                                    # (B, F, 1)
        k_x_x = jnp.exp(-jnp.sum((xe - xe) ** 2, axis=1) * c)[:, 0]
        k_x_V = jnp.exp(-jnp.sum((xe - Vg[None, :, :]) ** 2, axis=1) * c)   # (B, D)
        diff_VV = jnp.transpose(Vg)[:, :, None] - Vg[None, :, :]            # (D, F, D)
        k_V_V = jnp.exp(-jnp.sum(diff_VV ** 2, axis=1) * c)                 # (D, D)
        betas.append(k_x_x - 2.0 * jnp.mean(k_x_V, axis=1) + jnp.mean(k_V_V))
        heads.append(x @ weights_t[g] + biases[g][None, :])
    sm = jax.nn.softmax(jnp.stack(betas, axis=1), axis=1)
    pred = sum(sm[:, g:g + 1] * heads[g] for g in range(G))
    return pred[:, :, None]


def _bf16_round(a):
    # Round test inputs through bf16 so the comparison is agnostic to the
    # number of bf16 passes the MXU uses for f32 matmuls.
    return a.astype(jnp.bfloat16).astype(jnp.float32)


if __name__ == "__main__":
    # Small shapes consistent with the module defaults.
    B, F, O = 4, 32, 8          # batch, feature_vector_size, output_size
    G, D = 2, 3                 # num_gdus, domain_dim
    SIGMA = 0.5                 # default sigma; similarity='MMD'; task='classification'

    key = jax.random.PRNGKey(0)
    k_x, k_v, k_w, k_b, k_x2 = jax.random.split(key, 5)

    x = _bf16_round(jax.random.normal(k_x, (B, F), dtype=jnp.float32))

    # Domain basis init: normal(mean=i*0.5*(-1)^i, std=(i+1)*0.1) per GDU i.
    v_keys = jax.random.split(k_v, G)
    domain_bases = _bf16_round(jnp.stack([
        jax.random.normal(v_keys[i], (F, D), dtype=jnp.float32)
        * ((i + 1) * 0.1) + (i * 0.5 * ((-1.0) ** i))
        for i in range(G)
    ]))                                                      # (G, F, D)

    # nn.Linear(F, O) init: U(-1/sqrt(F), 1/sqrt(F)); stored transposed (F, O).
    bound = 1.0 / np.sqrt(F)
    w_keys = jax.random.split(k_w, G)
    b_keys = jax.random.split(k_b, G)
    weights_t = _bf16_round(jnp.stack([
        jax.random.uniform(w_keys[i], (F, O), jnp.float32, -bound, bound)
        for i in range(G)
    ]))                                                      # (G, F, O)
    biases = _bf16_round(jnp.stack([
        jax.random.uniform(b_keys[i], (O,), jnp.float32, -bound, bound)
        for i in range(G)
    ]))                                                      # (G, O)

    # Single-tile path.
    fwd = jax.jit(partial(gdu_layer_forward, sigma=SIGMA))
    out = jax.block_until_ready(fwd(x, domain_bases, weights_t, biases))
    ref = reference_forward(x, domain_bases, weights_t, biases, sigma=SIGMA)
    np.testing.assert_allclose(np.asarray(out), np.asarray(ref),
                               rtol=1e-3, atol=1e-3)
    assert out.shape == (B, O, 1)

    # Multi-tile path with batch padding (B > block_b and B % TB != 0).
    B2 = 300
    x2 = _bf16_round(jax.random.normal(k_x2, (B2, F), dtype=jnp.float32))
    fwd2 = jax.jit(partial(gdu_layer_forward, sigma=SIGMA, block_b=128))
    out2 = jax.block_until_ready(fwd2(x2, domain_bases, weights_t, biases))
    ref2 = reference_forward(x2, domain_bases, weights_t, biases, sigma=SIGMA)
    np.testing.assert_allclose(np.asarray(out2), np.asarray(ref2),
                               rtol=1e-3, atol=1e-3)
    assert out2.shape == (B2, O, 1)

    print("KERNEL_OK")
</pallas_src>

<mosaic_0001>
module attributes {stable_mosaic.version = 11 : i64} {
  func.func @gdu_layer_kernel(%arg0: i32, %arg1: memref<8x32xf32, #tpu.memory_space<vmem>>, %arg2: memref<56x32xf32, #tpu.memory_space<vmem>>, %arg3: memref<8x32xf32, #tpu.memory_space<vmem>>, %arg4: memref<8x1xf32, #tpu.memory_space<vmem>>, %arg5: memref<16x1xf32, #tpu.memory_space<vmem>>, %arg6: memref<8x8xf32, #tpu.memory_space<vmem>>, %arg7: memref<2x1xf32, #tpu.memory_space<vmem>>, %arg8: memref<8x8xf32, #tpu.memory_space<vmem>>) attributes {dimension_semantics = [#tpu.dimension_semantics<parallel>], iteration_bounds = array<i64: 1>, scalar_prefetch = 0 : i64, scratch_operands = 0 : i64, tpu.core_type = #tpu.core_type<tc>, window_params = [{transform_indices = @transform_0, window_bounds = array<i64: 8, 32>}, {pipeline_mode = #tpu.pipeline_mode<synchronous>, transform_indices = @transform_1, window_bounds = array<i64: 56, 32>}, {pipeline_mode = #tpu.pipeline_mode<synchronous>, transform_indices = @transform_2, window_bounds = array<i64: 8, 32>}, {pipeline_mode = #tpu.pipeline_mode<synchronous>, transform_indices = @transform_3, window_bounds = array<i64: 8, 1>}, {pipeline_mode = #tpu.pipeline_mode<synchronous>, transform_indices = @transform_4, window_bounds = array<i64: 16, 1>}, {pipeline_mode = #tpu.pipeline_mode<synchronous>, transform_indices = @transform_5, window_bounds = array<i64: 8, 8>}, {pipeline_mode = #tpu.pipeline_mode<synchronous>, transform_indices = @transform_6, window_bounds = array<i64: 2, 1>}, {transform_indices = @transform_7, window_bounds = array<i64: 8, 8>}]} {
    %c0 = arith.constant 0 : index
    %c0_0 = arith.constant 0 : index
    %0 = vector.load %arg1[%c0, %c0_0] : memref<8x32xf32, #tpu.memory_space<vmem>>, vector<8x32xf32>
    %c0_1 = arith.constant 0 : index
    %c0_2 = arith.constant 0 : index
    %1 = vector.load %arg2[%c0_1, %c0_2] : memref<56x32xf32, #tpu.memory_space<vmem>>, vector<56x32xf32>
    %cst = arith.constant dense<0.000000e+00> : vector<56x8xf32>
    %2 = tpu.matmul %1, %0, %cst {dimension_numbers = #tpu.dot_dimension_numbers<[1], [1], [0], [0], [0, 0, 1, 0], [], []>} : vector<56x32xf32>, vector<8x32xf32>, vector<56x8xf32> -> vector<56x8xf32>
    %3 = vector.extract_strided_slice %2 {offsets = [0, 0], sizes = [8, 8], strides = [1, 1]} : vector<56x8xf32> to vector<8x8xf32>
    %4 = vector.extract_strided_slice %2 {offsets = [8, 0], sizes = [16, 8], strides = [1, 1]} : vector<56x8xf32> to vector<16x8xf32>
    %c0_3 = arith.constant 0 : index
    %c0_4 = arith.constant 0 : index
    %5 = vector.load %arg5[%c0_3, %c0_4] : memref<16x1xf32, #tpu.memory_space<vmem>>, vector<16x1xf32>
    %6 = vector.broadcast %5 : vector<16x1xf32> to vector<16x8xf32>
    %7 = arith.addf %4, %6 : vector<16x8xf32>
    %8 = vector.extract_strided_slice %2 {offsets = [24, 0], sizes = [32, 8], strides = [1, 1]} : vector<56x8xf32> to vector<32x8xf32>
    %c0_5 = arith.constant 0 : index
    %c0_6 = arith.constant 0 : index
    %9 = vector.load %arg3[%c0_5, %c0_6] : memref<8x32xf32, #tpu.memory_space<vmem>>, vector<8x32xf32>
    %10 = arith.mulf %8, %8 : vector<32x8xf32>
    %cst_7 = arith.constant dense<0.000000e+00> : vector<8x8xf32>
    %11 = tpu.matmul %9, %10, %cst_7 {dimension_numbers = #tpu.dot_dimension_numbers<[1], [0], [0], [1], [0, 0, 1, 1], [], []>} : vector<8x32xf32>, vector<32x8xf32>, vector<8x8xf32> -> vector<8x8xf32>
    %c0_8 = arith.constant 0 : index
    %c0_9 = arith.constant 0 : index
    %12 = vector.load %arg4[%c0_8, %c0_9] : memref<8x1xf32, #tpu.memory_space<vmem>>, vector<8x1xf32>
    %13 = vector.broadcast %12 : vector<8x1xf32> to vector<8x8xf32>
    %14 = arith.addf %3, %13 : vector<8x8xf32>
    %15 = arith.subf %14, %11 : vector<8x8xf32>
    %16 = math.exp %15 : vector<8x8xf32>
    %c0_10 = arith.constant 0 : index
    %c0_11 = arith.constant 0 : index
    %17 = vector.load %arg6[%c0_10, %c0_11] : memref<8x8xf32, #tpu.memory_space<vmem>>, vector<8x8xf32>
    %cst_12 = arith.constant dense<0.000000e+00> : vector<8x8xf32>
    %18 = tpu.matmul %17, %16, %cst_12 {dimension_numbers = #tpu.dot_dimension_numbers<[1], [0], [0], [1], [0, 0, 1, 1], [], []>} : vector<8x8xf32>, vector<8x8xf32>, vector<8x8xf32> -> vector<8x8xf32>
    %19 = vector.extract_strided_slice %18 {offsets = [0, 0], sizes = [2, 8], strides = [1, 1]} : vector<8x8xf32> to vector<2x8xf32>
    %c0_13 = arith.constant 0 : index
    %c0_14 = arith.constant 0 : index
    %20 = vector.load %arg7[%c0_13, %c0_14] : memref<2x1xf32, #tpu.memory_space<vmem>>, vector<2x1xf32>
    %21 = vector.broadcast %20 : vector<2x1xf32> to vector<2x8xf32>
    %22 = arith.addf %19, %21 : vector<2x8xf32>
    %23 = vector.extract_strided_slice %22 {offsets = [0, 0], sizes = [1, 8], strides = [1, 1]} : vector<2x8xf32> to vector<1x8xf32>
    %24 = vector.extract_strided_slice %22 {offsets = [1, 0], sizes = [1, 8], strides = [1, 1]} : vector<2x8xf32> to vector<1x8xf32>
    %25 = arith.maximumf %23, %24 : vector<1x8xf32>
    %26 = vector.broadcast %25 : vector<1x8xf32> to vector<2x8xf32>
    %27 = arith.subf %22, %26 : vector<2x8xf32>
    %28 = math.exp %27 : vector<2x8xf32>
    %29 = vector.extract_strided_slice %28 {offsets = [0, 0], sizes = [1, 8], strides = [1, 1]} : vector<2x8xf32> to vector<1x8xf32>
    %30 = vector.extract_strided_slice %28 {offsets = [1, 0], sizes = [1, 8], strides = [1, 1]} : vector<2x8xf32> to vector<1x8xf32>
    %31 = arith.addf %29, %30 : vector<1x8xf32>
    %cst_15 = arith.constant 1.000000e+00 : f32
    %32 = vector.broadcast %cst_15 : f32 to vector<1x8xf32>
    %33 = arith.divf %32, %31 : vector<1x8xf32>
    %34 = vector.broadcast %33 : vector<1x8xf32> to vector<2x8xf32>
    %35 = arith.mulf %28, %34 : vector<2x8xf32>
    %36 = vector.extract_strided_slice %35 {offsets = [0, 0], sizes = [1, 8], strides = [1, 1]} : vector<2x8xf32> to vector<1x8xf32>
    %37 = vector.extract_strided_slice %7 {offsets = [0, 0], sizes = [8, 8], strides = [1, 1]} : vector<16x8xf32> to vector<8x8xf32>
    %38 = vector.broadcast %36 : vector<1x8xf32> to vector<8x8xf32>
    %39 = arith.mulf %38, %37 : vector<8x8xf32>
    %40 = vector.extract_strided_slice %35 {offsets = [1, 0], sizes = [1, 8], strides = [1, 1]} : vector<2x8xf32> to vector<1x8xf32>
    %41 = vector.extract_strided_slice %7 {offsets = [8, 0], sizes = [8, 8], strides = [1, 1]} : vector<16x8xf32> to vector<8x8xf32>
    %42 = vector.broadcast %40 : vector<1x8xf32> to vector<8x8xf32>
    %43 = arith.mulf %42, %41 : vector<8x8xf32>
    %44 = arith.addf %39, %43 : vector<8x8xf32>
    %c0_16 = arith.constant 0 : index
    %c0_17 = arith.constant 0 : index
    %45 = vector.load %arg8[%c0_16, %c0_17] : memref<8x8xf32, #tpu.memory_space<vmem>>, vector<8x8xf32>
    tpu.vector_store %arg8[%c0_16, %c0_17], %44 {strides = array<i32>} : memref<8x8xf32, #tpu.memory_space<vmem>>, vector<8x8xf32>,
    return
  }
  func.func @transform_0(%arg0: i32) -> (i32, i32) {
    %c0_i32 = arith.constant 0 : i32
    %c0_i32_0 = arith.constant 0 : i32
    return %arg0, %c0_i32 : i32, i32
  }
  func.func @transform_1(%arg0: i32) -> (i32, i32) {
    %c0_i32 = arith.constant 0 : i32
    %c0_i32_0 = arith.constant 0 : i32
    %c0_i32_1 = arith.constant 0 : i32
    return %c0_i32, %c0_i32_0 : i32, i32
  }
  func.func @transform_2(%arg0: i32) -> (i32, i32) {
    %c0_i32 = arith.constant 0 : i32
    %c0_i32_0 = arith.constant 0 : i32
    %c0_i32_1 = arith.constant 0 : i32
    return %c0_i32, %c0_i32_0 : i32, i32
  }
  func.func @transform_3(%arg0: i32) -> (i32, i32) {
    %c0_i32 = arith.constant 0 : i32
    %c0_i32_0 = arith.constant 0 : i32
    %c0_i32_1 = arith.constant 0 : i32
    return %c0_i32, %c0_i32_0 : i32, i32
  }
  func.func @transform_4(%arg0: i32) -> (i32, i32) {
    %c0_i32 = arith.constant 0 : i32
    %c0_i32_0 = arith.constant 0 : i32
    %c0_i32_1 = arith.constant 0 : i32
    return %c0_i32, %c0_i32_0 : i32, i32
  }
  func.func @transform_5(%arg0: i32) -> (i32, i32) {
    %c0_i32 = arith.constant 0 : i32
    %c0_i32_0 = arith.constant 0 : i32
    %c0_i32_1 = arith.constant 0 : i32
    return %c0_i32, %c0_i32_0 : i32, i32
  }
  func.func @transform_6(%arg0: i32) -> (i32, i32) {
    %c0_i32 = arith.constant 0 : i32
    %c0_i32_0 = arith.constant 0 : i32
    %c0_i32_1 = arith.constant 0 : i32
    return %c0_i32, %c0_i32_0 : i32, i32
  }
  func.func @transform_7(%arg0: i32) -> (i32, i32) {
    %c0_i32 = arith.constant 0 : i32
    %c0_i32_0 = arith.constant 0 : i32
    return %c0_i32, %arg0 : i32, i32
  }
}

</mosaic_0001>

<llo_original>
// kernel: gdu_layer_forward.1
$region0: #{gdu_layer_forward.1}
  #allocation0 [shape = 'u32[]', space=smem, size = 0x4, offset = 0x4, fixed_abs, tag = 'smem constant byte address 0x4 - core index']
  #allocation1 [shape = 'u32[72,128]{1,0:T(1,128)}', space=vmem, size = 0x9000, scoped, tag = 'internal scratch']
  %s0 = inlined_call_operand.vmem [shape: f32[8,32], index: 0, kind: input, shape index: {}]
  %s1 = inlined_call_operand.vmem [shape: f32[56,32], index: 1, kind: input, shape index: {}]
  %s2 = inlined_call_operand.vmem [shape: f32[8,32], index: 2, kind: input, shape index: {}]
  %s3 = inlined_call_operand.vmem [shape: f32[8,1], index: 3, kind: input, shape index: {}]
  %s4 = inlined_call_operand.vmem [shape: f32[16,1], index: 4, kind: input, shape index: {}]
  %s5 = inlined_call_operand.vmem [shape: f32[8,8], index: 5, kind: input, shape index: {}]
  %s6 = inlined_call_operand.vmem [shape: f32[2,1], index: 6, kind: input, shape index: {}]
  %s7 = inlined_call_operand.vmem [shape: f32[8,8], index: 7, kind: output, shape index: {}]
  %s8 = sld [smem:[#allocation0]]
  $region38: #{gdu_layer_forward.1} parent=0
    _
  %s10 = ssub.s32 1, %s8
  %s11 = scalar_select 0, %s10, %s8
  // Predicated region
  $region2: #{gdu_layer_forward.1} parent=0 // pred_check
    _
  $region3: #{gdu_layer_forward.1} parent=0 // pred_check_branch
    %13 = sbr.rel (0) target = $region5
  $region4: #{gdu_layer_forward.1} parent=0 // pred_region
    _
  $region5: #{gdu_layer_forward.1} parent=0 // pred_fallthru
    _
  // Predicated region
  $region6: #{gdu_layer_forward.1} parent=0 // pred_check
    _
  $region7: #{gdu_layer_forward.1} parent=0 // pred_check_branch
    %15 = sbr.rel (0) target = $region9
  $region8: #{gdu_layer_forward.1} parent=0 // pred_region
    _
  $region9: #{gdu_layer_forward.1} parent=0 // pred_fallthru
    _
  // Predicated region
  $region10: #{gdu_layer_forward.1} parent=0 // pred_check
    _
  $region11: #{gdu_layer_forward.1} parent=0 // pred_check_branch
    %17 = sbr.rel (0) target = $region13
  $region12: #{gdu_layer_forward.1} parent=0 // pred_region
    _
  $region13: #{gdu_layer_forward.1} parent=0 // pred_fallthru
    _
  // Predicated region
  $region14: #{gdu_layer_forward.1} parent=0 // pred_check
    _
  $region15: #{gdu_layer_forward.1} parent=0 // pred_check_branch
    %19 = sbr.rel (0) target = $region17
  $region16: #{gdu_layer_forward.1} parent=0 // pred_region
    _
  $region17: #{gdu_layer_forward.1} parent=0 // pred_fallthru
    _
  // Predicated region
  $region18: #{gdu_layer_forward.1} parent=0 // pred_check
    _
  $region19: #{gdu_layer_forward.1} parent=0 // pred_check_branch
    %21 = sbr.rel (0) target = $region21
  $region20: #{gdu_layer_forward.1} parent=0 // pred_region
    _
  $region21: #{gdu_layer_forward.1} parent=0 // pred_fallthru
    _
  // Predicated region
  $region22: #{gdu_layer_forward.1} parent=0 // pred_check
    _
  $region23: #{gdu_layer_forward.1} parent=0 // pred_check_branch
    %23 = sbr.rel (0) target = $region25
  $region24: #{gdu_layer_forward.1} parent=0 // pred_region
    _
  $region25: #{gdu_layer_forward.1} parent=0 // pred_fallthru
    _
  // Predicated region
  $region26: #{gdu_layer_forward.1} parent=0 // pred_check
    _
  $region27: #{gdu_layer_forward.1} parent=0 // pred_check_branch
    %25 = sbr.rel (0) target = $region29
  $region28: #{gdu_layer_forward.1} parent=0 // pred_region
    _
  $region29: #{gdu_layer_forward.1} parent=0 // pred_fallthru
    _
  %v26 = vld [vmem:[%s0] sm:$0xff]
  %v27 = vld [vmem:[%s1] sm:$0xff]
  %v28 = vld [vmem:[%s1 + $0x8] sm:$0xff]
  %v29 = vld [vmem:[%s1 + $0x10] sm:$0xff]
  %v30 = vld [vmem:[%s1 + $0x18] sm:$0xff]
  %v31 = vld [vmem:[%s1 + $0x20] sm:$0xff]
  %v32 = vld [vmem:[%s1 + $0x28] sm:$0xff]
  %v33 = vld [vmem:[%s1 + $0x30] sm:$0xff]
  %vm34 = vcmask 261120
  %v36 = vsel %vm34, %v27, 0
  %v39 = vsel %vm34, %v28, 0
  %v42 = vsel %vm34, %v29, 0
  %v45 = vsel %vm34, %v30, 0
  %v48 = vsel %vm34, %v31, 0
  %v51 = vsel %vm34, %v32, 0
  %v54 = vsel %vm34, %v33, 0
  %v57 = vsel %vm34, %v26, 0
  %59 = vmatpush.xpose.msra.mxu0 0.0
  %60 = vmatpush.xpose.msra.mxu0 0.0
  %61 = vmatpush.xpose.msra.mxu0 0.0
  %62 = vmatpush.xpose.msra.mxu0 0.0
  %63 = vmatpush.xpose.msra.mxu0 0.0
  %64 = vmatpush.xpose.msra.mxu0 0.0
  %65 = vmatpush.xpose.msra.mxu0 0.0
  %66 = vmatpush.xpose.msra.mxu0 0.0
  %67 = vmatpush.xpose.msra.mxu0 0.0
  %68 = vmatpush.xpose.msra.mxu0 0.0
  %69 = vmatpush.xpose.msra.mxu0 0.0
  %70 = vmatpush.xpose.msra.mxu0 0.0
  %71 = vmatpush.xpose.msra.mxu0 0.0
  %72 = vmatpush.xpose.msra.mxu0 0.0
  %73 = vmatpush.xpose.msra.mxu0 0.0
  %74 = vmatpush.xpose.msra.mxu0 %v57
  %75 = vmatmul.f32.gmra.mxu0 %v36
  %v76 = vpop.f32.mrf.mxu0
  %v77 = vadd.f32 0.0, %v76
  %78 = vmatmul.f32.gmra.mxu0 %v39
  %v79 = vpop.f32.mrf.mxu0
  %v80 = vadd.f32 0.0, %v79
  %81 = vmatmul.f32.gmra.mxu0 %v42
  %v82 = vpop.f32.mrf.mxu0
  %v83 = vadd.f32 0.0, %v82
  %84 = vmatmul.f32.gmra.mxu0 %v45
  %v85 = vpop.f32.mrf.mxu0
  %v86 = vadd.f32 0.0, %v85
  %87 = vmatmul.f32.gmra.mxu0 %v48
  %v88 = vpop.f32.mrf.mxu0
  %v89 = vadd.f32 0.0, %v88
  %90 = vmatmul.f32.gmra.mxu0 %v51
  %v91 = vpop.f32.mrf.mxu0
  %v92 = vadd.f32 0.0, %v91
  %93 = vmatmul.f32.gmra.mxu0 %v54
  %v94 = vpop.f32.mrf.mxu0
  %v95 = vadd.f32 0.0, %v94
  %96 = vdwg.mxu0
  %v97 = vld [vmem:[%s4] sm:$0xff]
  %v98 = vld [vmem:[%s4 + $0x8] sm:$0xff]
  %100 = vset.pattern.permute.xlu0 0
  %101 = vperm.xlu0 %100, %v97
  %v102 = vpop.permute.xlu0 %101
  %105 = vset.pattern.permute.xlu0 0
  %106 = vperm.xlu0 %105, %v98
  %v107 = vpop.permute.xlu0 %106
  %v109 = vadd.f32 %v80, %v102
  %v110 = vadd.f32 %v83, %v107
  %v111 = vld [vmem:[%s2] sm:$0xff]
  %v112 = vmul.f32 %v86, %v86
  %v113 = vmul.f32 %v89, %v89
  %v114 = vmul.f32 %v92, %v92
  %v115 = vmul.f32 %v95, %v95
  %v117 = vsel %vm34, %v111, 0
  %119 = vmatpush.msra.mxu0 0.0
  %120 = vmatpush.msra.mxu0 0.0
  %121 = vmatpush.msra.mxu0 0.0
  %122 = vmatpush.msra.mxu0 0.0
  %123 = vmatpush.msra.mxu0 0.0
  %124 = vmatpush.msra.mxu0 0.0
  %125 = vmatpush.msra.mxu0 0.0
  %126 = vmatpush.msra.mxu0 0.0
  %127 = vmatpush.msra.mxu0 0.0
  %128 = vmatpush.msra.mxu0 0.0
  %129 = vmatpush.msra.mxu0 0.0
  %130 = vmatpush.msra.mxu0 0.0
  %131 = vmatpush.msra.mxu0 %v115
  %132 = vmatpush.msra.mxu0 %v114
  %133 = vmatpush.msra.mxu0 %v113
  %134 = vmatpush.msra.mxu0 %v112
  %135 = vmatmul.f32.gmra.mxu0 %v117
  %v136 = vpop.f32.mrf.mxu0
  %v137 = vadd.f32 0.0, %v136
  %138 = vdwg.mxu0
  %v139 = vld [vmem:[%s3] sm:$0xff]
  %141 = vset.pattern.permute.xlu0 0
  %142 = vperm.xlu0 %141, %v139
  %v143 = vpop.permute.xlu0 %142
  %v145 = vadd.f32 %v77, %v143
  %v146 = vsub.f32 %v145, %v137
  %v147 = vmul.f32 %v146, 1.442695
  %v148 = vpow.pop %v147
  %v149 = vld [vmem:[%s5] sm:$0xff]
  %vm150 = vcmask 64512
  %v152 = vsel %vm150, %v149, 0
  %154 = vmatpush.msra.mxu0 0.0
  %155 = vmatpush.msra.mxu0 0.0
  %156 = vmatpush.msra.mxu0 0.0
  %157 = vmatpush.msra.mxu0 0.0
  %158 = vmatpush.msra.mxu0 0.0
  %159 = vmatpush.msra.mxu0 0.0
  %160 = vmatpush.msra.mxu0 0.0
  %161 = vmatpush.msra.mxu0 0.0
  %162 = vmatpush.msra.mxu0 0.0
  %163 = vmatpush.msra.mxu0 0.0
  %164 = vmatpush.msra.mxu0 0.0
  %165 = vmatpush.msra.mxu0 0.0
  %166 = vmatpush.msra.mxu0 0.0
  %167 = vmatpush.msra.mxu0 0.0
  %168 = vmatpush.msra.mxu0 0.0
  %169 = vmatpush.msra.mxu0 %v148
  %170 = vmatmul.f32.gmra.mxu0 %v152
  %v171 = vpop.f32.mrf.mxu0
  %v172 = vadd.f32 0.0, %v171
  %173 = vdwg.mxu0
  %v174 = vld [vmem:[%s6] sm:$0x3]
  %176 = vset.pattern.permute.xlu0 0
  %177 = vperm.xlu0 %176, %v174
  %v178 = vpop.permute.xlu0 %177
  %v180 = vadd.f32 %v172, %v178
  %v182 = vrot.slane %v180, 1
  %v184 = vmax.f32 %v180, %v182
  %v185 = vperm.slane %v184, 0
  %v186 = vsub.f32 %v180, %v185
  %v187 = vmul.f32 %v186, 1.442695
  %v188 = vpow.pop %v187
  %v190 = vrot.slane %v188, 1
  %v192 = vadd.f32 %v188, %v190
  %v193 = vrcp.pop %v192
  %v194 = vmul.f32 %v192, %v193
  %v195 = vsub.f32 1.0, %v194
  %v196 = vmul.f32 %v193, %v195
  %v197 = vadd.f32 %v193, %v196
  %vm198 = vweird.f32 %v192
  %vm199 = vweird.f32 %v193
  %vm200 = vmor %vm198, %vm199
  %v201 = vsel %vm200, %v193, %v197
  %v202 = vand.u32 2147483647, %v192
  %vm203 = vcmp.eq.f32.partialorder %v202, 8.507059e+37
  %v204 = vand.u32 %v192, 2147483648
  %v205 = vor.u32 1.1754944e-38, %v204
  %v206 = vsel %vm203, %v205, %v201
  %v207 = vmul.f32 1.0, %v206
  %v208 = vperm.slane %v207, 0
  %v209 = vmul.f32 %v188, %v208
  %v210 = vperm.slane %v209, 0
  %v211 = vmul.f32 %v210, %v109
  %v212 = vperm.slane %v209, 1
  %v213 = vmul.f32 %v212, %v110
  %v214 = vadd.f32 %v211, %v213
  %215 = vst.msk [vmem:[%s7] sm:$0xff] %vm150, %v214
  // Predicated region
  $region30: #{gdu_layer_forward.1} parent=0 // pred_check
    _
  $region31: #{gdu_layer_forward.1} parent=0 // pred_check_branch
    %217 = sbr.rel (0) target = $region33
  $region32: #{gdu_layer_forward.1} parent=0 // pred_region
    _
  $region33: #{gdu_layer_forward.1} parent=0 // pred_fallthru
    _
  // Predicated region
  $region34: #{gdu_layer_forward.1} parent=0 // pred_check
    _
  $region35: #{gdu_layer_forward.1} parent=0 // pred_check_branch
    %219 = sbr.rel (0) target = $region37
  $region36: #{gdu_layer_forward.1} parent=0 // pred_region
    _
  $region37: #{gdu_layer_forward.1} parent=0 // pred_fallthru
    _

</llo_original>
